<compile_context>
chip_gen: v6e
topology: v6e:2x2x1
jax: 0.10.0
libtpu: 0.0.40
codegen_flags: <defaults>
</compile_context>

<pallas_src>
import functools

import jax
import jax.numpy as jnp
from jax.experimental import pallas as pl
from jax.experimental.pallas import tpu as pltpu


_LANE = 128
_SUBLANE = 8
_TINY_TILE_BYTES = 256 << 10   # grid=(1,1) only below this (per review)
_TILE_TARGET_BYTES = 3 << 20   # ~3 MiB x tiles: near HBM roofline, keeps pipelining
_TILE_MAX_BYTES = 8 << 20      # hard cap so 2x-buffered tiles stay small vs VMEM


def _rdown(v, m):
    return (v // m) * m


def _rup(v, m):
    return -(-v // m) * m


def _choose_tiles(batch, n_features):
    """Pick (block_rows, block_features) for f32 tiles of x.

    Policy (perf review):
      * single block only for tiny problems (<= 256 KiB),
      * ~2-4 MiB tiles, targeting >= 8 row blocks (>= 4 grid steps per v7x core),
      * feature-axis (reduction) tiling only when a 128-row tile of the whole
        feature dim would exceed the tile cap; block widths balanced so the
        ragged feature tail stays small.
    """
    row_bytes = 4 * n_features
    total_bytes = batch * row_bytes

    if total_bytes <= _TINY_TILE_BYTES:
        return batch, n_features

    if _LANE * row_bytes <= _TILE_MAX_BYTES:
        # Whole feature dim per tile: tile rows only (grid_k == 1).
        bm = max(_LANE, _rdown(_TILE_TARGET_BYTES // row_bytes, _LANE))
        # Keep >= 8 row blocks when the batch is large enough.
        bm = min(bm, max(_LANE, _rup(pl.cdiv(batch, 8), _LANE)))
        if bm >= batch:
            bm = batch
        return bm, n_features

    # Huge feature dim: tile the reduction axis too; rows stay lane-dense.
    bm = 2 * _LANE if batch > 2 * _LANE else batch
    nk_target = max(_LANE, _TILE_TARGET_BYTES // (4 * bm))
    grid_k = max(2, pl.cdiv(n_features, nk_target))
    nk = _rup(pl.cdiv(n_features, grid_k), _LANE)   # balanced, 128-aligned widths
    nk = min(nk, _rdown(n_features, _LANE))
    return bm, max(_LANE, nk)


def _vmem_limit_bytes(bm, nk):
    """Double-buffered x tile + stage-1 partials + accumulator/result + output
    blocks + compiler scratch headroom.  Kept well under v7x's 64 MiB."""
    x_tiles = 2 * 4 * bm * nk
    small = 4 * bm * (_LANE + 2 * _SUBLANE + 2)
    need = x_tiles + 2 * small + (8 << 20)
    return int(max(16 << 20, min(need, 60 << 20)))


def _tile_row_sumsq(x_ref, feat_start, *, nk, n_features, n_chunks, rem, grid_k):
    """Lane-dense (8, bm) row-wise sum of squares of one (bm, nk) tile of x.

    Stage 1 (VPU): squares of 128-lane chunks summed elementwise into (bm, 128)
    partials, so only the small partials ever touch the MXU transposed-operand
    path.  Stage 2 (MXU): ones(8,128) reduce-as-matmul on the partials giving
    the lane-dense (8, bm) row sums; Precision.HIGHEST avoids bf16 truncation.
    Padded columns of the ragged last feature block are masked; the mask is
    emitted only for statically tail-overlapping chunks (no-op on other blocks).
    """
    result = None

    parts = None
    for c in range(n_chunks):
        xc = x_ref[:, c * _LANE:(c + 1) * _LANE].astype(jnp.float32)
        sq = xc * xc
        # Static: does this chunk overlap the padded tail of the LAST feature
        # block?  For earlier blocks the predicate below is all-true (no-op).
        if (grid_k - 1) * nk + (c + 1) * _LANE > n_features:
            col = jax.lax.broadcasted_iota(jnp.int32, sq.shape, 1)
            sq = jnp.where(feat_start + c * _LANE + col < n_features, sq, 0.0)
        parts = sq if parts is None else parts + sq

    if parts is not None:
        result = jax.lax.dot_general(
            jnp.ones((_SUBLANE, _LANE), jnp.float32), parts,
            dimension_numbers=(((1,), (1,)), ((), ())),
            precision=jax.lax.Precision.HIGHEST,
            preferred_element_type=jnp.float32)

    if rem:
        # Only reached when the whole feature dim lives in one tile (grid_k==1)
        # and n_features % 128 != 0: small direct reduce-as-matmul on the tail.
        lo = n_chunks * _LANE
        xr = x_ref[:, lo:lo + rem].astype(jnp.float32)
        tail = jax.lax.dot_general(
            jnp.ones((_SUBLANE, rem), jnp.float32), xr * xr,
            dimension_numbers=(((1,), (1,)), ((), ())),
            precision=jax.lax.Precision.HIGHEST,
            preferred_element_type=jnp.float32)
        result = tail if result is None else result + tail

    return result


def _ynet_kernel_single_k(theta_ref, x_ref, o_ref, *, nk, n_features, n_chunks, rem):
    # Common path: whole feature dim in this tile.  No accumulator, no RMW.
    sums = _tile_row_sumsq(x_ref, 0, nk=nk, n_features=n_features,
                           n_chunks=n_chunks, rem=rem, grid_k=1)
    o_ref[...] = (theta_ref[0] * sums[0:1, :]).astype(o_ref.dtype)


def _ynet_kernel_multi_k(theta_ref, x_ref, o_ref, acc_ref, *,
                         nk, n_features, n_chunks, grid_k):
    # Huge feature dim: reduction over the last ("arbitrary") grid axis into a
    # lane-dense (8, bm) VMEM accumulator.
    k = pl.program_id(1)

    @pl.when(k == 0)
    def _init():
        acc_ref[...] = jnp.zeros_like(acc_ref)

    acc_ref[...] += _tile_row_sumsq(x_ref, k * nk, nk=nk, n_features=n_features,
                                    n_chunks=n_chunks, rem=0, grid_k=grid_k)

    @pl.when(k == pl.num_programs(1) - 1)
    def _finalize():
        o_ref[...] = (theta_ref[0] * acc_ref[0:1, :]).astype(o_ref.dtype)


def model2_forward(theta, t, x, *, block_rows=None, block_features=None):
    """Pallas TPU implementation of Model2.forward(t, x).

    Args:
      theta: (1,) parameter (YNet.theta).
      t:     (..., 1) time input (unused by the math, kept for API parity).
      x:     (..., n) state input.
    Returns:
      (..., 1) float32 array equal to theta * sum(x*x, axis=-1, keepdims=True).
    """
    del t  # YNet ignores t in its forward pass.
    orig_shape = x.shape
    n_features = int(orig_shape[-1])
    lead = tuple(int(d) for d in orig_shape[:-1])
    batch = 1
    for d in lead:
        batch *= d

    x2 = jnp.asarray(x, jnp.float32).reshape(batch, n_features)
    theta32 = jnp.asarray(theta, jnp.float32).reshape((1,))

    if block_rows is None and block_features is None:
        bm, nk = _choose_tiles(batch, n_features)
    else:
        bm = int(block_rows) if block_rows is not None else batch
        nk = int(block_features) if block_features is not None else n_features
        bm = min(bm, batch)
        nk = min(nk, n_features)

    grid_m = pl.cdiv(batch, bm)
    grid_k = pl.cdiv(n_features, nk)
    n_chunks, rem = divmod(nk, _LANE)

    # Layout / legality guards: x blocks must be (8,128)-divisible or full-dim;
    # lane-dense (1, bm) output blocks need bm % 128 == 0 once batch is tiled.
    if grid_m > 1 and bm % _LANE != 0:
        raise ValueError("block_rows must be a multiple of 128 when batch is tiled")
    if grid_k > 1 and rem != 0:
        raise ValueError("block_features must be a multiple of 128 when the "
                         "feature axis is tiled")

    vmem_limit = _vmem_limit_bytes(bm, nk)
    cost = pl.CostEstimate(
        flops=2 * batch * n_features,
        transcendentals=0,
        bytes_accessed=4 * batch * n_features + 4 * batch + 4,
    )
    out_shape = jax.ShapeDtypeStruct((1, grid_m * bm), jnp.float32)
    theta_spec = pl.BlockSpec(memory_space=pltpu.SMEM)

    if grid_k == 1:
        kernel = functools.partial(
            _ynet_kernel_single_k,
            nk=nk, n_features=n_features, n_chunks=n_chunks, rem=rem)
        out = pl.pallas_call(
            kernel,
            out_shape=out_shape,
            grid=(grid_m,),
            in_specs=[theta_spec,
                      pl.BlockSpec((bm, nk), lambda i: (i, 0))],
            out_specs=pl.BlockSpec((1, bm), lambda i: (0, i)),
            compiler_params=pltpu.CompilerParams(
                dimension_semantics=("parallel",),
                vmem_limit_bytes=vmem_limit),
            cost_estimate=cost,
        )(theta32, x2)
    else:
        kernel = functools.partial(
            _ynet_kernel_multi_k,
            nk=nk, n_features=n_features, n_chunks=n_chunks, grid_k=grid_k)
        out = pl.pallas_call(
            kernel,
            out_shape=out_shape,
            grid=(grid_m, grid_k),          # reduction axis last ("arbitrary")
            in_specs=[theta_spec,
                      pl.BlockSpec((bm, nk), lambda i, k: (i, k))],
            out_specs=pl.BlockSpec((1, bm), lambda i, k: (0, i)),
            scratch_shapes=[pltpu.VMEM((8, bm), jnp.float32)],
            compiler_params=pltpu.CompilerParams(
                dimension_semantics=("parallel", "arbitrary"),
                vmem_limit_bytes=vmem_limit),
            cost_estimate=cost,
        )(theta32, x2)

    return out[0, :batch].reshape(lead + (1,))


if __name__ == "__main__":
    key = jax.random.PRNGKey(0)
    k1, k2, k3, k4, k5, k6 = jax.random.split(key, 6)

    # Parameter initialized exactly as in YNet.__init__: theta = [-1.0].
    theta = jnp.array([-1.0], dtype=jnp.float32)

    def _ref(th, xs):
        return th * jnp.sum(xs * xs, axis=-1, keepdims=True)

    # 1) Tiny shape consistent with the (..., 1)/(..., n) contract: single-block
    #    path with a < 128-wide feature dim (tail reduce-as-matmul).
    B, N = 8, 32
    t1 = jax.random.normal(k1, (B, 1), dtype=jnp.float32)
    x1 = jax.random.normal(k2, (B, N), dtype=jnp.float32)
    out1 = jax.block_until_ready(model2_forward(theta, t1, x1))
    ref1 = _ref(theta, x1)
    assert out1.shape == ref1.shape
    assert jnp.allclose(out1, ref1, rtol=1e-5, atol=1e-5)

    # 2) Auto-tiled grid_k == 1 path: several row blocks with a ragged row tail,
    #    VPU stage-1 chunking, no accumulator / no masking.
    B2, N2 = 520, 256
    t2 = jax.random.normal(k3, (B2, 1), dtype=jnp.float32)
    x2 = jax.random.normal(k4, (B2, N2), dtype=jnp.float32)
    out2 = jax.block_until_ready(model2_forward(theta, t2, x2))
    ref2 = _ref(theta, x2)
    assert out2.shape == ref2.shape
    assert jnp.allclose(out2, ref2, rtol=1e-5, atol=1e-5)

    # 3) Forced K-tiled path: feature-axis accumulator, masked ragged feature
    #    tail, and a ragged row tail.
    B3, N3 = 300, 160
    t3 = jax.random.normal(k5, (B3, 1), dtype=jnp.float32)
    x3 = jax.random.normal(k6, (B3, N3), dtype=jnp.float32)
    out3 = jax.block_until_ready(
        model2_forward(theta, t3, x3, block_rows=128, block_features=128))
    ref3 = _ref(theta, x3)
    assert out3.shape == ref3.shape
    assert jnp.allclose(out3, ref3, rtol=1e-5, atol=1e-5)

    print("KERNEL_OK")
</pallas_src>

<mosaic_0001>
module attributes {stable_mosaic.version = 11 : i64} {
  func.func @_ynet_kernel_single_k(%arg0: i32, %arg1: memref<1xf32, #tpu.memory_space<smem>>, %arg2: memref<8x32xf32, #tpu.memory_space<vmem>>, %arg3: memref<1x8xf32, #tpu.memory_space<vmem>>) attributes {dimension_semantics = [#tpu.dimension_semantics<parallel>], iteration_bounds = array<i64: 1>, scalar_prefetch = 0 : i64, scratch_operands = 0 : i64, tpu.core_type = #tpu.core_type<tc>, window_params = [{transform_indices = @transform_0, window_bounds = array<i64: 1>}, {transform_indices = @transform_1, window_bounds = array<i64: 8, 32>}, {transform_indices = @transform_2, window_bounds = array<i64: 1, 8>}]} {
    %c0 = arith.constant 0 : index
    %c0_0 = arith.constant 0 : index
    %0 = vector.load %arg2[%c0, %c0_0] : memref<8x32xf32, #tpu.memory_space<vmem>>, vector<8x32xf32>
    %cst = arith.constant 1.000000e+00 : f32
    %1 = vector.broadcast %cst : f32 to vector<8x32xf32>
    %2 = arith.mulf %0, %0 : vector<8x32xf32>
    %cst_1 = arith.constant dense<0.000000e+00> : vector<8x8xf32>
    %3 = tpu.matmul %1, %2, %cst_1 {dimension_numbers = #tpu.dot_dimension_numbers<[1], [1], [0], [0], [0, 0, 1, 0], [], []>, precision = #tpu.contract_precision<fp32>} : vector<8x32xf32>, vector<8x32xf32>, vector<8x8xf32> -> vector<8x8xf32>
    %c0_2 = arith.constant 0 : index
    %4 = memref.load %arg1[%c0_2] : memref<1xf32, #tpu.memory_space<smem>>
    %5 = vector.extract_strided_slice %3 {offsets = [0, 0], sizes = [1, 8], strides = [1, 1]} : vector<8x8xf32> to vector<1x8xf32>
    %6 = vector.broadcast %4 : f32 to vector<1x8xf32>
    %7 = arith.mulf %6, %5 : vector<1x8xf32>
    %c0_3 = arith.constant 0 : index
    %c0_4 = arith.constant 0 : index
    %8 = vector.load %arg3[%c0_3, %c0_4] : memref<1x8xf32, #tpu.memory_space<vmem>>, vector<1x8xf32>
    tpu.vector_store %arg3[%c0_3, %c0_4], %7 {strides = array<i32>} : memref<1x8xf32, #tpu.memory_space<vmem>>, vector<1x8xf32>,
    return
  }
  func.func @transform_0(%arg0: i32) -> i32 {
    %c0_i32 = arith.constant 0 : i32
    %c0_i32_0 = arith.constant 0 : i32
    return %c0_i32 : i32
  }
  func.func @transform_1(%arg0: i32) -> (i32, i32) {
    %c0_i32 = arith.constant 0 : i32
    %c0_i32_0 = arith.constant 0 : i32
    return %arg0, %c0_i32 : i32, i32
  }
  func.func @transform_2(%arg0: i32) -> (i32, i32) {
    %c0_i32 = arith.constant 0 : i32
    %c0_i32_0 = arith.constant 0 : i32
    return %c0_i32, %arg0 : i32, i32
  }
}

</mosaic_0001>

<llo_original>
// kernel: tpu_custom_call.1
$region0: #{tpu_custom_call.1}
  #allocation0 [shape = 'u32[]', space=smem, size = 0x4, offset = 0x4, fixed_abs, tag = 'smem constant byte address 0x4 - core index']
  #allocation1 [shape = 'u32[144,128]{1,0:T(1,128)}', space=vmem, size = 0x12000, scoped, tag = 'internal scratch']
  #allocation2 [shape = 'f32[1]{0:T(128)S(6)}', space=smem, size = 0x200, scoped, tag = 'scoped memory for tpu_custom_call.1']
  %s0 = inlined_call_operand.<no memory space> [shape: f32[1], index: 0, kind: input, shape index: {}]
  %s1 = inlined_call_operand.hbm [shape: f32[8,32], index: 1, kind: input, shape index: {}]
  %s2 = inlined_call_operand.hbm [shape: f32[1,8], index: 2, kind: output, shape index: {}]
  %s3 = sld [smem:[#allocation0]]
  $region22: #{tpu_custom_call.1} parent=0
    _
  %s5 = ssub.s32 1, %s3
  %s6 = scalar_select 0, %s5, %s3
  %7 = sst [smem:[#allocation2]] %s0
  $region1: #{tpu_custom_call.1} parent=0
    #allocation3 [shape = 'u8[4096]{0}', space=vmem, size = 0x1000, scoped, tag = 'input window, operand 1, single buffered']
    #allocation4 [shape = 's32[1]{0}', space=sflag, size = 0x4, scoped, tag = 'scoped memory for tpu_custom_call.1']
    #allocation5 [shape = 's32[1]{0}', space=sflag, size = 0x4, scoped, tag = 'scoped memory for tpu_custom_call.1']
    #allocation6 [shape = 'u8[512]{0}', space=vmem, size = 0x400, scoped, tag = 'output window, operand 0, single buffered']
    %8 = vsyncpa [#allocation4], 0
    %9 = vsyncpa [#allocation5], 0
    // Predicated region
    $region2: #{tpu_custom_call.1} parent=1 // pred_check
      _
    $region3: #{tpu_custom_call.1} parent=1 // pred_check_branch
      %11 = sbr.rel (0) target = $region5
    $region4: #{tpu_custom_call.1} parent=1 // pred_region
      _
    $region5: #{tpu_custom_call.1} parent=1 // pred_fallthru
      _
    // Predicated region
    $region6: #{tpu_custom_call.1} parent=1 // pred_check
      _
    $region7: #{tpu_custom_call.1} parent=1 // pred_check_branch
      %13 = sbr.rel (0) target = $region9
    $region8: #{tpu_custom_call.1} parent=1 // pred_region
      %s15 = ssub.s32 128, 128
      %16 = vsyncadd [#allocation4], %s15
      %s18 = sshll.u32 [#allocation3], 4
      %s19 = int_to_ptr.vmem [resolvable:$true] %s18
      %21 = dma.hbm_to_vmem [thread:$0]  %s1, 128, %s19, [#allocation4]
    $region9: #{tpu_custom_call.1} parent=1 // pred_fallthru
      _
    // Predicated region
    $region10: #{tpu_custom_call.1} parent=1 // pred_check
      _
    $region11: #{tpu_custom_call.1} parent=1 // pred_check_branch
      %23 = sbr.rel (0) target = $region13
    $region12: #{tpu_custom_call.1} parent=1 // pred_region
      %24 = dma.done [#allocation4], 128
    $region13: #{tpu_custom_call.1} parent=1 // pred_fallthru
      _
    %v25 = vld [vmem:[#allocation3] sm:$0xff]
    %v26 = vmul.f32 %v25, %v25
    %vm27 = vcmask 261120
    %v29 = vsel %vm27, 1.0, 0
    %v32 = vsel %vm27, %v26, 0
    %34 = vmatprep.subr.mxu0 0.0
    %35 = vmatpush1.xpose.msra.mxu0 0.0
    %36 = vmatprep.subr.mxu0 0.0
    %37 = vmatpush1.xpose.msra.mxu0 0.0
    %38 = vmatprep.subr.mxu0 0.0
    %39 = vmatpush1.xpose.msra.mxu0 0.0
    %40 = vmatprep.subr.mxu0 0.0
    %41 = vmatpush1.xpose.msra.mxu0 0.0
    %42 = vmatprep.subr.mxu0 0.0
    %43 = vmatpush1.xpose.msra.mxu0 0.0
    %44 = vmatprep.subr.mxu0 0.0
    %45 = vmatpush1.xpose.msra.mxu0 0.0
    %46 = vmatprep.subr.mxu0 0.0
    %47 = vmatpush1.xpose.msra.mxu0 0.0
    %48 = vmatprep.subr.mxu0 0.0
    %49 = vmatpush1.xpose.msra.mxu0 0.0
    %50 = vmatprep.subr.mxu0 0.0
    %51 = vmatpush1.xpose.msra.mxu0 0.0
    %52 = vmatprep.subr.mxu0 0.0
    %53 = vmatpush1.xpose.msra.mxu0 0.0
    %54 = vmatprep.subr.mxu0 0.0
    %55 = vmatpush1.xpose.msra.mxu0 0.0
    %56 = vmatprep.subr.mxu0 0.0
    %57 = vmatpush1.xpose.msra.mxu0 0.0
    %58 = vmatprep.subr.mxu0 0.0
    %59 = vmatpush1.xpose.msra.mxu0 0.0
    %60 = vmatprep.subr.mxu0 0.0
    %61 = vmatpush1.xpose.msra.mxu0 0.0
    %62 = vmatprep.subr.mxu0 0.0
    %63 = vmatpush1.xpose.msra.mxu0 0.0
    %64 = vmatprep.subr.mxu0 0.0
    %v65 = vand.u32 %v32, 4294901760
    %66 = vmatpush1.xpose.msra.mxu0 %v65
    %67 = vmatprep.subr.mxu0 0.0
    %68 = vmatpush2.xpose.msra.mxu0 0.0
    %69 = vmatprep.subr.mxu0 0.0
    %70 = vmatpush2.xpose.msra.mxu0 0.0
    %71 = vmatprep.subr.mxu0 0.0
    %72 = vmatpush2.xpose.msra.mxu0 0.0
    %73 = vmatprep.subr.mxu0 0.0
    %74 = vmatpush2.xpose.msra.mxu0 0.0
    %75 = vmatprep.subr.mxu0 0.0
    %76 = vmatpush2.xpose.msra.mxu0 0.0
    %77 = vmatprep.subr.mxu0 0.0
    %78 = vmatpush2.xpose.msra.mxu0 0.0
    %79 = vmatprep.subr.mxu0 0.0
    %80 = vmatpush2.xpose.msra.mxu0 0.0
    %81 = vmatprep.subr.mxu0 0.0
    %82 = vmatpush2.xpose.msra.mxu0 0.0
    %83 = vmatprep.subr.mxu0 0.0
    %84 = vmatpush2.xpose.msra.mxu0 0.0
    %85 = vmatprep.subr.mxu0 0.0
    %86 = vmatpush2.xpose.msra.mxu0 0.0
    %87 = vmatprep.subr.mxu0 0.0
    %88 = vmatpush2.xpose.msra.mxu0 0.0
    %89 = vmatprep.subr.mxu0 0.0
    %90 = vmatpush2.xpose.msra.mxu0 0.0
    %91 = vmatprep.subr.mxu0 0.0
    %92 = vmatpush2.xpose.msra.mxu0 0.0
    %93 = vmatprep.subr.mxu0 0.0
    %94 = vmatpush2.xpose.msra.mxu0 0.0
    %95 = vmatprep.subr.mxu0 0.0
    %96 = vmatpush2.xpose.msra.mxu0 0.0
    %97 = vmatprep.subr.mxu0 0.0
    %98 = vmatpush2.xpose.msra.mxu0 0.0
    %99 = vmatprep.mubr.f32.mxu0 0.0
    %v100 = vand.u32 %v29, 4294901760
    %v101 = vsub.f32 %v29, %v100
    %v102 = vand.u32 %v101, 4294901760
    %v103 = vsub.f32 %v101, %v102
    %v104 = vand.u32 %v103, 4294901760
    %105 = vmatmul.mubr.f32.gmra.mxu0 %v104
    %v106 = vpop.f32.mrf.mxu0
    %v107 = vadd.f32 0.0, %v106
    %v108 = vpop.f32.mrf.mxu0
    %109 = vdwg.mxu0
    %110 = vmatprep.subr.mxu0 0.0
    %111 = vmatpush1.xpose.msra.mxu0 0.0
    %112 = vmatprep.subr.mxu0 0.0
    %113 = vmatpush1.xpose.msra.mxu0 0.0
    %114 = vmatprep.subr.mxu0 0.0
    %115 = vmatpush1.xpose.msra.mxu0 0.0
    %116 = vmatprep.subr.mxu0 0.0
    %117 = vmatpush1.xpose.msra.mxu0 0.0
    %118 = vmatprep.subr.mxu0 0.0
    %119 = vmatpush1.xpose.msra.mxu0 0.0
    %120 = vmatprep.subr.mxu0 0.0
    %121 = vmatpush1.xpose.msra.mxu0 0.0
    %122 = vmatprep.subr.mxu0 0.0
    %123 = vmatpush1.xpose.msra.mxu0 0.0
    %124 = vmatprep.subr.mxu0 0.0
    %125 = vmatpush1.xpose.msra.mxu0 0.0
    %126 = vmatprep.subr.mxu0 0.0
    %127 = vmatpush1.xpose.msra.mxu0 0.0
    %128 = vmatprep.subr.mxu0 0.0
    %129 = vmatpush1.xpose.msra.mxu0 0.0
    %130 = vmatprep.subr.mxu0 0.0
    %131 = vmatpush1.xpose.msra.mxu0 0.0
    %132 = vmatprep.subr.mxu0 0.0
    %133 = vmatpush1.xpose.msra.mxu0 0.0
    %134 = vmatprep.subr.mxu0 0.0
    %135 = vmatpush1.xpose.msra.mxu0 0.0
    %136 = vmatprep.subr.mxu0 0.0
    %137 = vmatpush1.xpose.msra.mxu0 0.0
    %138 = vmatprep.subr.mxu0 0.0
    %139 = vmatpush1.xpose.msra.mxu0 0.0
    %140 = vmatprep.subr.mxu0 0.0
    %v141 = vand.u32 %v32, 4294901760
    %v142 = vsub.f32 %v32, %v141
    %v143 = vand.u32 %v142, 4294901760
    %v144 = vsub.f32 %v142, %v143
    %v145 = vand.u32 %v144, 4294901760
    %146 = vmatpush1.xpose.msra.mxu0 %v145
    %147 = vmatprep.subr.mxu0 0.0
    %148 = vmatpush2.xpose.msra.mxu0 0.0
    %149 = vmatprep.subr.mxu0 0.0
    %150 = vmatpush2.xpose.msra.mxu0 0.0
    %151 = vmatprep.subr.mxu0 0.0
    %152 = vmatpush2.xpose.msra.mxu0 0.0
    %153 = vmatprep.subr.mxu0 0.0
    %154 = vmatpush2.xpose.msra.mxu0 0.0
    %155 = vmatprep.subr.mxu0 0.0
    %156 = vmatpush2.xpose.msra.mxu0 0.0
    %157 = vmatprep.subr.mxu0 0.0
    %158 = vmatpush2.xpose.msra.mxu0 0.0
    %159 = vmatprep.subr.mxu0 0.0
    %160 = vmatpush2.xpose.msra.mxu0 0.0
    %161 = vmatprep.subr.mxu0 0.0
    %162 = vmatpush2.xpose.msra.mxu0 0.0
    %163 = vmatprep.subr.mxu0 0.0
    %164 = vmatpush2.xpose.msra.mxu0 0.0
    %165 = vmatprep.subr.mxu0 0.0
    %166 = vmatpush2.xpose.msra.mxu0 0.0
    %167 = vmatprep.subr.mxu0 0.0
    %168 = vmatpush2.xpose.msra.mxu0 0.0
    %169 = vmatprep.subr.mxu0 0.0
    %170 = vmatpush2.xpose.msra.mxu0 0.0
    %171 = vmatprep.subr.mxu0 0.0
    %172 = vmatpush2.xpose.msra.mxu0 0.0
    %173 = vmatprep.subr.mxu0 0.0
    %174 = vmatpush2.xpose.msra.mxu0 0.0
    %175 = vmatprep.subr.mxu0 0.0
    %176 = vmatpush2.xpose.msra.mxu0 0.0
    %177 = vmatprep.subr.mxu0 0.0
    %178 = vmatpush2.xpose.msra.mxu0 0.0
    %179 = vmatprep.mubr.f32.mxu0 0.0
    %v180 = vand.u32 %v29, 4294901760
    %181 = vmatmul.mubr.f32.gmra.mxu0 %v180
    %v182 = vpop.f32.mrf.mxu0
    %v183 = vadd.f32 %v107, %v182
    %v184 = vpop.f32.mrf.mxu0
    %185 = vdwg.mxu0
    %186 = vmatprep.subr.mxu0 0.0
    %187 = vmatpush1.xpose.msra.mxu0 0.0
    %188 = vmatprep.subr.mxu0 0.0
    %189 = vmatpush1.xpose.msra.mxu0 0.0
    %190 = vmatprep.subr.mxu0 0.0
    %191 = vmatpush1.xpose.msra.mxu0 0.0
    %192 = vmatprep.subr.mxu0 0.0
    %193 = vmatpush1.xpose.msra.mxu0 0.0
    %194 = vmatprep.subr.mxu0 0.0
    %195 = vmatpush1.xpose.msra.mxu0 0.0
    %196 = vmatprep.subr.mxu0 0.0
    %197 = vmatpush1.xpose.msra.mxu0 0.0
    %198 = vmatprep.subr.mxu0 0.0
    %199 = vmatpush1.xpose.msra.mxu0 0.0
    %200 = vmatprep.subr.mxu0 0.0
    %201 = vmatpush1.xpose.msra.mxu0 0.0
    %202 = vmatprep.subr.mxu0 0.0
    %203 = vmatpush1.xpose.msra.mxu0 0.0
    %204 = vmatprep.subr.mxu0 0.0
    %205 = vmatpush1.xpose.msra.mxu0 0.0
    %206 = vmatprep.subr.mxu0 0.0
    %207 = vmatpush1.xpose.msra.mxu0 0.0
    %208 = vmatprep.subr.mxu0 0.0
    %209 = vmatpush1.xpose.msra.mxu0 0.0
    %210 = vmatprep.subr.mxu0 0.0
    %211 = vmatpush1.xpose.msra.mxu0 0.0
    %212 = vmatprep.subr.mxu0 0.0
    %213 = vmatpush1.xpose.msra.mxu0 0.0
    %214 = vmatprep.subr.mxu0 0.0
    %215 = vmatpush1.xpose.msra.mxu0 0.0
    %216 = vmatprep.subr.mxu0 0.0
    %v217 = vand.u32 %v32, 4294901760
    %v218 = vsub.f32 %v32, %v217
    %219 = vmatpush1.xpose.msra.mxu0 %v218
    %220 = vmatprep.subr.mxu0 0.0
    %221 = vmatpush2.xpose.msra.mxu0 0.0
    %222 = vmatprep.subr.mxu0 0.0
    %223 = vmatpush2.xpose.msra.mxu0 0.0
    %224 = vmatprep.subr.mxu0 0.0
    %225 = vmatpush2.xpose.msra.mxu0 0.0
    %226 = vmatprep.subr.mxu0 0.0
    %227 = vmatpush2.xpose.msra.mxu0 0.0
    %228 = vmatprep.subr.mxu0 0.0
    %229 = vmatpush2.xpose.msra.mxu0 0.0
    %230 = vmatprep.subr.mxu0 0.0
    %231 = vmatpush2.xpose.msra.mxu0 0.0
    %232 = vmatprep.subr.mxu0 0.0
    %233 = vmatpush2.xpose.msra.mxu0 0.0
    %234 = vmatprep.subr.mxu0 0.0
    %235 = vmatpush2.xpose.msra.mxu0 0.0
    %236 = vmatprep.subr.mxu0 0.0
    %237 = vmatpush2.xpose.msra.mxu0 0.0
    %238 = vmatprep.subr.mxu0 0.0
    %239 = vmatpush2.xpose.msra.mxu0 0.0
    %240 = vmatprep.subr.mxu0 0.0
    %241 = vmatpush2.xpose.msra.mxu0 0.0
    %242 = vmatprep.subr.mxu0 0.0
    %243 = vmatpush2.xpose.msra.mxu0 0.0
    %244 = vmatprep.subr.mxu0 0.0
    %245 = vmatpush2.xpose.msra.mxu0 0.0
    %246 = vmatprep.subr.mxu0 0.0
    %247 = vmatpush2.xpose.msra.mxu0 0.0
    %248 = vmatprep.subr.mxu0 0.0
    %249 = vmatpush2.xpose.msra.mxu0 0.0
    %250 = vmatprep.subr.mxu0 0.0
    %251 = vmatpush2.xpose.msra.mxu0 0.0
    %252 = vmatprep.mubr.f32.mxu0 0.0
    %v253 = vand.u32 %v29, 4294901760
    %v254 = vsub.f32 %v29, %v253
    %255 = vmatmul.mubr.f32.gmra.mxu0 %v254
    %v256 = vpop.f32.mrf.mxu0
    %v257 = vadd.f32 %v183, %v256
    %v258 = vpop.f32.mrf.mxu0
    %259 = vdwg.mxu0
    %260 = vmatprep.subr.mxu0 0.0
    %261 = vmatpush1.xpose.msra.mxu0 0.0
    %262 = vmatprep.subr.mxu0 0.0
    %263 = vmatpush1.xpose.msra.mxu0 0.0
    %264 = vmatprep.subr.mxu0 0.0
    %265 = vmatpush1.xpose.msra.mxu0 0.0
    %266 = vmatprep.subr.mxu0 0.0
    %267 = vmatpush1.xpose.msra.mxu0 0.0
    %268 = vmatprep.subr.mxu0 0.0
    %269 = vmatpush1.xpose.msra.mxu0 0.0
    %270 = vmatprep.subr.mxu0 0.0
    %271 = vmatpush1.xpose.msra.mxu0 0.0
    %272 = vmatprep.subr.mxu0 0.0
    %273 = vmatpush1.xpose.msra.mxu0 0.0
    %274 = vmatprep.subr.mxu0 0.0
    %275 = vmatpush1.xpose.msra.mxu0 0.0
    %276 = vmatprep.subr.mxu0 0.0
    %277 = vmatpush1.xpose.msra.mxu0 0.0
    %278 = vmatprep.subr.mxu0 0.0
    %279 = vmatpush1.xpose.msra.mxu0 0.0
    %280 = vmatprep.subr.mxu0 0.0
    %281 = vmatpush1.xpose.msra.mxu0 0.0
    %282 = vmatprep.subr.mxu0 0.0
    %283 = vmatpush1.xpose.msra.mxu0 0.0
    %284 = vmatprep.subr.mxu0 0.0
    %285 = vmatpush1.xpose.msra.mxu0 0.0
    %286 = vmatprep.subr.mxu0 0.0
    %287 = vmatpush1.xpose.msra.mxu0 0.0
    %288 = vmatprep.subr.mxu0 0.0
    %289 = vmatpush1.xpose.msra.mxu0 0.0
    %290 = vmatprep.subr.mxu0 0.0
    %v291 = vand.u32 %v32, 4294901760
    %292 = vmatpush1.xpose.msra.mxu0 %v291
    %293 = vmatprep.subr.mxu0 0.0
    %294 = vmatpush2.xpose.msra.mxu0 0.0
    %295 = vmatprep.subr.mxu0 0.0
    %296 = vmatpush2.xpose.msra.mxu0 0.0
    %297 = vmatprep.subr.mxu0 0.0
    %298 = vmatpush2.xpose.msra.mxu0 0.0
    %299 = vmatprep.subr.mxu0 0.0
    %300 = vmatpush2.xpose.msra.mxu0 0.0
    %301 = vmatprep.subr.mxu0 0.0
    %302 = vmatpush2.xpose.msra.mxu0 0.0
    %303 = vmatprep.subr.mxu0 0.0
    %304 = vmatpush2.xpose.msra.mxu0 0.0
    %305 = vmatprep.subr.mxu0 0.0
    %306 = vmatpush2.xpose.msra.mxu0 0.0
    %307 = vmatprep.subr.mxu0 0.0
    %308 = vmatpush2.xpose.msra.mxu0 0.0
    %309 = vmatprep.subr.mxu0 0.0
    %310 = vmatpush2.xpose.msra.mxu0 0.0
    %311 = vmatprep.subr.mxu0 0.0
    %312 = vmatpush2.xpose.msra.mxu0 0.0
    %313 = vmatprep.subr.mxu0 0.0
    %314 = vmatpush2.xpose.msra.mxu0 0.0
    %315 = vmatprep.subr.mxu0 0.0
    %316 = vmatpush2.xpose.msra.mxu0 0.0
    %317 = vmatprep.subr.mxu0 0.0
    %318 = vmatpush2.xpose.msra.mxu0 0.0
    %319 = vmatprep.subr.mxu0 0.0
    %320 = vmatpush2.xpose.msra.mxu0 0.0
    %321 = vmatprep.subr.mxu0 0.0
    %322 = vmatpush2.xpose.msra.mxu0 0.0
    %323 = vmatprep.subr.mxu0 0.0
    %324 = vmatpush2.xpose.msra.mxu0 0.0
    %325 = vmatprep.mubr.f32.mxu0 0.0
    %v326 = vand.u32 %v29, 4294901760
    %v327 = vsub.f32 %v29, %v326
    %v328 = vand.u32 %v327, 4294901760
    %329 = vmatmul.mubr.f32.gmra.mxu0 %v328
    %v330 = vpop.f32.mrf.mxu0
    %v331 = vadd.f32 %v257, %v330
    %v332 = vpop.f32.mrf.mxu0
    %333 = vdwg.mxu0
    %334 = vmatprep.subr.mxu0 0.0
    %335 = vmatpush1.xpose.msra.mxu0 0.0
    %336 = vmatprep.subr.mxu0 0.0
    %337 = vmatpush1.xpose.msra.mxu0 0.0
    %338 = vmatprep.subr.mxu0 0.0
    %339 = vmatpush1.xpose.msra.mxu0 0.0
    %340 = vmatprep.subr.mxu0 0.0
    %341 = vmatpush1.xpose.msra.mxu0 0.0
    %342 = vmatprep.subr.mxu0 0.0
    %343 = vmatpush1.xpose.msra.mxu0 0.0
    %344 = vmatprep.subr.mxu0 0.0
    %345 = vmatpush1.xpose.msra.mxu0 0.0
    %346 = vmatprep.subr.mxu0 0.0
    %347 = vmatpush1.xpose.msra.mxu0 0.0
    %348 = vmatprep.subr.mxu0 0.0
    %349 = vmatpush1.xpose.msra.mxu0 0.0
    %350 = vmatprep.subr.mxu0 0.0
    %351 = vmatpush1.xpose.msra.mxu0 0.0
    %352 = vmatprep.subr.mxu0 0.0
    %353 = vmatpush1.xpose.msra.mxu0 0.0
    %354 = vmatprep.subr.mxu0 0.0
    %355 = vmatpush1.xpose.msra.mxu0 0.0
    %356 = vmatprep.subr.mxu0 0.0
    %357 = vmatpush1.xpose.msra.mxu0 0.0
    %358 = vmatprep.subr.mxu0 0.0
    %359 = vmatpush1.xpose.msra.mxu0 0.0
    %360 = vmatprep.subr.mxu0 0.0
    %361 = vmatpush1.xpose.msra.mxu0 0.0
    %362 = vmatprep.subr.mxu0 0.0
    %363 = vmatpush1.xpose.msra.mxu0 0.0
    %364 = vmatprep.subr.mxu0 0.0
    %v365 = vand.u32 %v32, 4294901760
    %v366 = vsub.f32 %v32, %v365
    %v367 = vand.u32 %v366, 4294901760
    %368 = vmatpush1.xpose.msra.mxu0 %v367
    %369 = vmatprep.subr.mxu0 0.0
    %370 = vmatpush2.xpose.msra.mxu0 0.0
    %371 = vmatprep.subr.mxu0 0.0
    %372 = vmatpush2.xpose.msra.mxu0 0.0
    %373 = vmatprep.subr.mxu0 0.0
    %374 = vmatpush2.xpose.msra.mxu0 0.0
    %375 = vmatprep.subr.mxu0 0.0
    %376 = vmatpush2.xpose.msra.mxu0 0.0
    %377 = vmatprep.subr.mxu0 0.0
    %378 = vmatpush2.xpose.msra.mxu0 0.0
    %379 = vmatprep.subr.mxu0 0.0
    %380 = vmatpush2.xpose.msra.mxu0 0.0
    %381 = vmatprep.subr.mxu0 0.0
    %382 = vmatpush2.xpose.msra.mxu0 0.0
    %383 = vmatprep.subr.mxu0 0.0
    %384 = vmatpush2.xpose.msra.mxu0 0.0
    %385 = vmatprep.subr.mxu0 0.0
    %386 = vmatpush2.xpose.msra.mxu0 0.0
    %387 = vmatprep.subr.mxu0 0.0
    %388 = vmatpush2.xpose.msra.mxu0 0.0
    %389 = vmatprep.subr.mxu0 0.0
    %390 = vmatpush2.xpose.msra.mxu0 0.0
    %391 = vmatprep.subr.mxu0 0.0
    %392 = vmatpush2.xpose.msra.mxu0 0.0
    %393 = vmatprep.subr.mxu0 0.0
    %394 = vmatpush2.xpose.msra.mxu0 0.0
    %395 = vmatprep.subr.mxu0 0.0
    %396 = vmatpush2.xpose.msra.mxu0 0.0
    %397 = vmatprep.subr.mxu0 0.0
    %398 = vmatpush2.xpose.msra.mxu0 0.0
    %399 = vmatprep.subr.mxu0 0.0
    %400 = vmatpush2.xpose.msra.mxu0 0.0
    %401 = vmatprep.mubr.f32.mxu0 0.0
    %v402 = vand.u32 %v29, 4294901760
    %403 = vmatmul.mubr.f32.gmra.mxu0 %v402
    %v404 = vpop.f32.mrf.mxu0
    %v405 = vadd.f32 %v331, %v404
    %v406 = vpop.f32.mrf.mxu0
    %407 = vdwg.mxu0
    %408 = vmatprep.subr.mxu0 0.0
    %409 = vmatpush1.xpose.msra.mxu0 0.0
    %410 = vmatprep.subr.mxu0 0.0
    %411 = vmatpush1.xpose.msra.mxu0 0.0
    %412 = vmatprep.subr.mxu0 0.0
    %413 = vmatpush1.xpose.msra.mxu0 0.0
    %414 = vmatprep.subr.mxu0 0.0
    %415 = vmatpush1.xpose.msra.mxu0 0.0
    %416 = vmatprep.subr.mxu0 0.0
    %417 = vmatpush1.xpose.msra.mxu0 0.0
    %418 = vmatprep.subr.mxu0 0.0
    %419 = vmatpush1.xpose.msra.mxu0 0.0
    %420 = vmatprep.subr.mxu0 0.0
    %421 = vmatpush1.xpose.msra.mxu0 0.0
    %422 = vmatprep.subr.mxu0 0.0
    %423 = vmatpush1.xpose.msra.mxu0 0.0
    %424 = vmatprep.subr.mxu0 0.0
    %425 = vmatpush1.xpose.msra.mxu0 0.0
    %426 = vmatprep.subr.mxu0 0.0
    %427 = vmatpush1.xpose.msra.mxu0 0.0
    %428 = vmatprep.subr.mxu0 0.0
    %429 = vmatpush1.xpose.msra.mxu0 0.0
    %430 = vmatprep.subr.mxu0 0.0
    %431 = vmatpush1.xpose.msra.mxu0 0.0
    %432 = vmatprep.subr.mxu0 0.0
    %433 = vmatpush1.xpose.msra.mxu0 0.0
    %434 = vmatprep.subr.mxu0 0.0
    %435 = vmatpush1.xpose.msra.mxu0 0.0
    %436 = vmatprep.subr.mxu0 0.0
    %437 = vmatpush1.xpose.msra.mxu0 0.0
    %438 = vmatprep.subr.mxu0 0.0
    %v439 = vand.u32 %v32, 4294901760
    %440 = vmatpush1.xpose.msra.mxu0 %v439
    %441 = vmatprep.subr.mxu0 0.0
    %442 = vmatpush2.xpose.msra.mxu0 0.0
    %443 = vmatprep.subr.mxu0 0.0
    %444 = vmatpush2.xpose.msra.mxu0 0.0
    %445 = vmatprep.subr.mxu0 0.0
    %446 = vmatpush2.xpose.msra.mxu0 0.0
    %447 = vmatprep.subr.mxu0 0.0
    %448 = vmatpush2.xpose.msra.mxu0 0.0
    %449 = vmatprep.subr.mxu0 0.0
    %450 = vmatpush2.xpose.msra.mxu0 0.0
    %451 = vmatprep.subr.mxu0 0.0
    %452 = vmatpush2.xpose.msra.mxu0 0.0
    %453 = vmatprep.subr.mxu0 0.0
    %454 = vmatpush2.xpose.msra.mxu0 0.0
    %455 = vmatprep.subr.mxu0 0.0
    %456 = vmatpush2.xpose.msra.mxu0 0.0
    %457 = vmatprep.subr.mxu0 0.0
    %458 = vmatpush2.xpose.msra.mxu0 0.0
    %459 = vmatprep.subr.mxu0 0.0
    %460 = vmatpush2.xpose.msra.mxu0 0.0
    %461 = vmatprep.subr.mxu0 0.0
    %462 = vmatpush2.xpose.msra.mxu0 0.0
    %463 = vmatprep.subr.mxu0 0.0
    %464 = vmatpush2.xpose.msra.mxu0 0.0
    %465 = vmatprep.subr.mxu0 0.0
    %466 = vmatpush2.xpose.msra.mxu0 0.0
    %467 = vmatprep.subr.mxu0 0.0
    %468 = vmatpush2.xpose.msra.mxu0 0.0
    %469 = vmatprep.subr.mxu0 0.0
    %470 = vmatpush2.xpose.msra.mxu0 0.0
    %471 = vmatprep.subr.mxu0 0.0
    %472 = vmatpush2.xpose.msra.mxu0 0.0
    %473 = vmatprep.mubr.f32.mxu0 0.0
    %v474 = vand.u32 %v29, 4294901760
    %475 = vmatmul.mubr.f32.gmra.mxu0 %v474
    %v476 = vpop.f32.mrf.mxu0
    %v477 = vadd.f32 %v405, %v476
    %v478 = vpop.f32.mrf.mxu0
    %479 = vdwg.mxu0
    %s480 = sld [smem:[#allocation2]]
    %v481 = vstv %s480
    %v482 = vmul.f32 %v481, %v477
    %vm483 = vcmask 57344
    %484 = vst.msk [vmem:[#allocation6] sm:$0x1] %vm483, %v482
    // Predicated region
    $region14: #{tpu_custom_call.1} parent=1 // pred_check
      _
    $region15: #{tpu_custom_call.1} parent=1 // pred_check_branch
      %486 = sbr.rel (0) target = $region17
    $region16: #{tpu_custom_call.1} parent=1 // pred_region
      %s488 = ssub.s32 16, 16
      %489 = vsyncadd [#allocation5], %s488
      %s491 = sshll.u32 [#allocation6], 4
      %s492 = int_to_ptr.vmem [resolvable:$true] %s491
      %494 = dma.vmem_to_hbm [thread:$0]  %s492, 16, %s2, [#allocation5]
    $region17: #{tpu_custom_call.1} parent=1 // pred_fallthru
      _
    // Predicated region
    $region18: #{tpu_custom_call.1} parent=1 // pred_check
      _
    $region19: #{tpu_custom_call.1} parent=1 // pred_check_branch
      %496 = sbr.rel (0) target = $region21
    $region20: #{tpu_custom_call.1} parent=1 // pred_region
      %497 = dma.done [#allocation5], 16
    $region21: #{tpu_custom_call.1} parent=1 // pred_fallthru
      _
    %498 = vsyncpa [#allocation4], 1
    %499 = vsyncpa [#allocation5], 1

</llo_original>
